<compile_context>
chip_gen: v5e
topology: v5e:2x2
jax: 0.10.0
libtpu: 0.0.40
codegen_flags: <defaults>
</compile_context>

<pallas_src>
import functools

import jax
import jax.numpy as jnp
from jax.experimental import pallas as pl
from jax.experimental.pallas import tpu as pltpu


def _round_up(x, m):
    return ((x + m - 1) // m) * m


def _lane_block_sum(x, width=128):
    """(Bt, TN) -> (Bt, width): sum aligned 128-lane blocks (pure vreg adds)."""
    tn = x.shape[-1]
    if tn <= width:
        return x
    acc = x[:, 0:width]
    for off in range(width, tn, width):
        acc = acc + x[:, off:off + width]
    return acc


def _dice_sums_kernel(pred_ref, gt_ref, isum_ref, dsum_ref, acc_i_ref, acc_d_ref,
                      *, apply_sigmoid, n_valid, tn):
    """One grid step over a (Bt, TN) tile of the flattened (rows, n_valid) inputs.

    Grid axis 0: batch-row tiles (parallel). Grid axis 1: spatial tiles
    (reduction). acc_i / acc_d are narrow (Bt, 128) VMEM accumulators that
    persist across the spatial axis.
    """
    s = pl.program_id(1)
    n_spatial = pl.num_programs(1)

    @pl.when(s == 0)
    def _():
        acc_i_ref[...] = jnp.zeros_like(acc_i_ref)
        acc_d_ref[...] = jnp.zeros_like(acc_d_ref)

    p = pred_ref[...].astype(jnp.float32)
    if apply_sigmoid:
        p = jax.nn.sigmoid(p)
    g = gt_ref[...].astype(jnp.float32)

    def accumulate(pv, gv):
        # Two reductions instead of three: intersect and combined denominator.
        acc_i_ref[...] += _lane_block_sum(pv * gv)
        acc_d_ref[...] += _lane_block_sum(pv + gv)

    if n_valid % tn != 0:
        # Ragged spatial tail: mask out-of-range columns, but only on the last
        # spatial tile so the hot path carries no per-element mask ops.
        @pl.when(s != n_spatial - 1)
        def _():
            accumulate(p, g)

        @pl.when(s == n_spatial - 1)
        def _():
            col = jax.lax.broadcasted_iota(jnp.int32, p.shape, dimension=1)
            valid = (s * tn + col) < n_valid
            accumulate(jnp.where(valid, p, 0.0), jnp.where(valid, g, 0.0))
    else:
        accumulate(p, g)

    @pl.when(s == n_spatial - 1)
    def _():
        # Single cross-lane (XLU) reduce per batch tile; one tiny writeback.
        isum_ref[...] = jnp.sum(acc_i_ref[...], axis=-1, keepdims=True)
        dsum_ref[...] = jnp.sum(acc_d_ref[...], axis=-1, keepdims=True)


def dice_loss(pred, gt, *, ret_mean=True, activation="sigmoid"):
    """Dice loss matching utils/loss.py::DiceLoss.forward.

    pred, gt: (B, H, W). Returns scalar if ret_mean else (B,) per-sample loss.
    'sigmoid' and 'none' activations are handled in-kernel.
    """
    assert pred.ndim == 3 and gt.shape == pred.shape
    # TODO(synk): 'softmax' activation (over dim=1) not implemented in-kernel;
    # the default/sigmoid path below covers the module's default configuration.
    assert activation in ("sigmoid", "none", None)
    apply_sigmoid = activation == "sigmoid"

    B, H, W = pred.shape
    N = H * W

    if gt.dtype == jnp.bool_:
        gt = gt.astype(jnp.float32)

    pred2 = pred.reshape(B, N)
    gt2 = gt.reshape(B, N)

    # ---- Sublane fold for small batches --------------------------------
    # (B, N) -> (B*R, N/R) is a free, contiguity-preserving reshape. It fills
    # all 8 sublanes per vreg when B < 8 and gives the parallel grid axis >= 2
    # tiles so both v7x TensorCores get work. Per-row partial sums are summed
    # back per sample in the wrapper (exact: dice sums are elementwise).
    R = 1
    if B <= 8:
        for r in (8, 4, 2):
            if N % r == 0 and N // r >= 128:
                R = r
                break
    rows = B * R
    N_row = N // R
    if R > 1:
        pred2 = pred2.reshape(rows, N_row)
        gt2 = gt2.reshape(rows, N_row)

    # ---- Tiling ---------------------------------------------------------
    # Spatial tile: lane-dense multiple of 128; cap 32768 so per-step HBM
    # input is ~2-4 MiB (amortizes the ~0.35 us per-step pipeline overhead).
    TN = min(_round_up(N_row, 128), 32768)

    max_item = max(pred2.dtype.itemsize, gt2.dtype.itemsize)
    min_item = min(pred2.dtype.itemsize, gt2.dtype.itemsize)
    if rows <= 8:
        Bt = rows  # full-extent block (allowed even if not a multiple of 8)
    else:
        # Batch-tile alignment matches packed sublane tiling of the narrowest
        # input dtype (8 for f32, 16 for bf16, 32 for int8).
        base = 8 * max(1, 4 // max(min_item, 1))
        # Keep a single input block <= ~2 MiB so (2 inputs x 2 pipeline
        # buffers) stays well under default scoped VMEM on v5e/v6e/v7x.
        bt_cap_vmem = max(base, ((2 << 20) // (TN * max_item)) // base * base)
        # Prefer >= 2 batch tiles so the v7x megacore parallel axis is fed.
        bt_cap_split = _round_up(-(-rows // 2), base)
        Bt = max(base, min(32, bt_cap_vmem, bt_cap_split))

    grid = (pl.cdiv(rows, Bt), pl.cdiv(N_row, TN))

    kernel = functools.partial(_dice_sums_kernel, apply_sigmoid=apply_sigmoid,
                               n_valid=N_row, tn=TN)

    isum, dsum = pl.pallas_call(
        kernel,
        out_shape=(jax.ShapeDtypeStruct((rows, 1), jnp.float32),
                   jax.ShapeDtypeStruct((rows, 1), jnp.float32)),
        grid_spec=pltpu.PrefetchScalarGridSpec(
            num_scalar_prefetch=0,
            grid=grid,
            in_specs=[
                pl.BlockSpec((Bt, TN), lambda b, s: (b, s)),
                pl.BlockSpec((Bt, TN), lambda b, s: (b, s)),
            ],
            # Output block index is constant along the spatial axis -> the
            # (Bt, 1) partial sums stay VMEM-resident and are written back
            # only once per batch tile (in the s == last epilogue).
            out_specs=[
                pl.BlockSpec((Bt, 1), lambda b, s: (b, 0)),
                pl.BlockSpec((Bt, 1), lambda b, s: (b, 0)),
            ],
            scratch_shapes=[
                pltpu.VMEM((Bt, 128), jnp.float32),  # intersect accumulator
                pltpu.VMEM((Bt, 128), jnp.float32),  # denominator accumulator
            ],
        ),
        compiler_params=pltpu.CompilerParams(
            dimension_semantics=("parallel", "arbitrary"),
        ),
    )(pred2, gt2)

    # Tiny O(B*R) epilogue in the wrapper: combine fold rows and form the loss.
    eps = jnp.float32(1e-05)
    intersect = isum[:, 0].reshape(B, R).sum(axis=1)
    denom = dsum[:, 0].reshape(B, R).sum(axis=1)
    loss = jnp.float32(1.0) - (2.0 * intersect + eps) / (denom + eps)
    if ret_mean:
        return jnp.mean(loss)
    return loss


def _reference_dice_loss(pred, gt, ret_mean=True):
    p = jax.nn.sigmoid(pred.astype(jnp.float32))
    g = gt.astype(jnp.float32)
    eps = 1e-05
    intersect = jnp.sum(p * g, axis=(1, 2))
    y_sum = jnp.sum(g, axis=(1, 2))
    z_sum = jnp.sum(p, axis=(1, 2))
    loss = 1.0 - (2.0 * intersect + eps) / (z_sum + y_sum + eps)
    return jnp.mean(loss) if ret_mean else loss


if __name__ == "__main__":
    key = jax.random.PRNGKey(0)
    k1, k2, k3, k4, k5, k6 = jax.random.split(key, 6)

    # Primary small test (matches the module's (B, H, W) layout); exercises the
    # sublane-fold path (B=2 < 8, N=256 divisible by 2).
    B, H, W = 2, 16, 16
    pred = jax.random.normal(k1, (B, H, W), dtype=jnp.float32)
    gt = (jax.random.uniform(k2, (B, H, W)) > 0.5).astype(jnp.float32)

    out = dice_loss(pred, gt, ret_mean=True)
    out = jax.block_until_ready(out)
    ref = _reference_dice_loss(pred, gt, ret_mean=True)
    assert jnp.allclose(out, ref, atol=1e-5, rtol=1e-5), (out, ref)

    # Ragged test: B > 8 (ragged batch tiles), H*W = 1221 (ragged spatial tail,
    # masked in-kernel -- no padding copies), ret_mean=False.
    B2, H2, W2 = 10, 33, 37
    pred2 = jax.random.normal(k3, (B2, H2, W2), dtype=jnp.float32)
    gt2 = (jax.random.uniform(k4, (B2, H2, W2)) > 0.5).astype(jnp.float32)

    out2 = dice_loss(pred2, gt2, ret_mean=False)
    out2 = jax.block_until_ready(out2)
    ref2 = _reference_dice_loss(pred2, gt2, ret_mean=False)
    assert out2.shape == (B2,)
    assert jnp.allclose(out2, ref2, atol=1e-5, rtol=1e-5), (out2, ref2)

    # Fold-by-8 test: B=3, 32x32 -> rows=24, multiple batch tiles + fold combine.
    B3, H3, W3 = 3, 32, 32
    pred3 = jax.random.normal(k5, (B3, H3, W3), dtype=jnp.float32)
    gt3 = (jax.random.uniform(k6, (B3, H3, W3)) > 0.5).astype(jnp.float32)

    out3 = dice_loss(pred3, gt3, ret_mean=True)
    out3 = jax.block_until_ready(out3)
    ref3 = _reference_dice_loss(pred3, gt3, ret_mean=True)
    assert jnp.allclose(out3, ref3, atol=1e-5, rtol=1e-5), (out3, ref3)

    print("KERNEL_OK")
</pallas_src>

<mosaic_0001>
module attributes {stable_mosaic.version = 11 : i64} {
  func.func @_dice_sums_kernel(%arg0: i32, %arg1: i32, %arg2: memref<4x128xf32, #tpu.memory_space<vmem>>, %arg3: memref<4x128xf32, #tpu.memory_space<vmem>>, %arg4: memref<4x1xf32, #tpu.memory_space<vmem>>, %arg5: memref<4x1xf32, #tpu.memory_space<vmem>>, %arg6: memref<4x128xf32, #tpu.memory_space<vmem>>, %arg7: memref<4x128xf32, #tpu.memory_space<vmem>>) attributes {dimension_semantics = [#tpu.dimension_semantics<parallel>, #tpu.dimension_semantics<arbitrary>], iteration_bounds = array<i64: 1, 1>, scalar_prefetch = 0 : i64, scratch_operands = 2 : i64, tpu.core_type = #tpu.core_type<tc>, window_params = [{transform_indices = @transform_0, window_bounds = array<i64: 4, 128>}, {transform_indices = @transform_1, window_bounds = array<i64: 4, 128>}, {transform_indices = @transform_2, window_bounds = array<i64: 4, 1>}, {transform_indices = @transform_3, window_bounds = array<i64: 4, 1>}]} {
    %c0_i32 = arith.constant 0 : i32
    %0 = arith.cmpi eq, %arg1, %c0_i32 : i32
    %1 = arith.extui %0 : i1 to i32
    %c0_i32_0 = arith.constant 0 : i32
    %2 = arith.cmpi ne, %1, %c0_i32_0 : i32
    scf.if %2 {
      %cst_14 = arith.constant 0.000000e+00 : f32
      %21 = vector.broadcast %cst_14 : f32 to vector<4x128xf32>
      %c0_15 = arith.constant 0 : index
      %c0_16 = arith.constant 0 : index
      %22 = vector.load %arg6[%c0_15, %c0_16] : memref<4x128xf32, #tpu.memory_space<vmem>>, vector<4x128xf32>
      tpu.vector_store %arg6[%c0_15, %c0_16], %21 {strides = array<i32>} : memref<4x128xf32, #tpu.memory_space<vmem>>, vector<4x128xf32>,
      %cst_17 = arith.constant 0.000000e+00 : f32
      %23 = vector.broadcast %cst_17 : f32 to vector<4x128xf32>
      %c0_18 = arith.constant 0 : index
      %c0_19 = arith.constant 0 : index
      %24 = vector.load %arg7[%c0_18, %c0_19] : memref<4x128xf32, #tpu.memory_space<vmem>>, vector<4x128xf32>
      tpu.vector_store %arg7[%c0_18, %c0_19], %23 {strides = array<i32>} : memref<4x128xf32, #tpu.memory_space<vmem>>, vector<4x128xf32>,
    } else {
    }
    %c0 = arith.constant 0 : index
    %c0_1 = arith.constant 0 : index
    %3 = vector.load %arg2[%c0, %c0_1] : memref<4x128xf32, #tpu.memory_space<vmem>>, vector<4x128xf32>
    %4 = arith.negf %3 : vector<4x128xf32>
    %5 = math.exp %4 : vector<4x128xf32>
    %cst = arith.constant 1.000000e+00 : f32
    %6 = vector.broadcast %cst : f32 to vector<4x128xf32>
    %7 = arith.addf %6, %5 : vector<4x128xf32>
    %8 = arith.divf %6, %7 : vector<4x128xf32>
    %c0_2 = arith.constant 0 : index
    %c0_3 = arith.constant 0 : index
    %9 = vector.load %arg3[%c0_2, %c0_3] : memref<4x128xf32, #tpu.memory_space<vmem>>, vector<4x128xf32>
    %c0_4 = arith.constant 0 : index
    %c0_5 = arith.constant 0 : index
    %10 = vector.load %arg6[%c0_4, %c0_5] : memref<4x128xf32, #tpu.memory_space<vmem>>, vector<4x128xf32>
    %11 = arith.mulf %8, %9 : vector<4x128xf32>
    %12 = arith.addf %10, %11 : vector<4x128xf32>
    %c0_6 = arith.constant 0 : index
    %c0_7 = arith.constant 0 : index
    %13 = vector.load %arg6[%c0_6, %c0_7] : memref<4x128xf32, #tpu.memory_space<vmem>>, vector<4x128xf32>
    tpu.vector_store %arg6[%c0_6, %c0_7], %12 {strides = array<i32>} : memref<4x128xf32, #tpu.memory_space<vmem>>, vector<4x128xf32>,
    %c0_8 = arith.constant 0 : index
    %c0_9 = arith.constant 0 : index
    %14 = vector.load %arg7[%c0_8, %c0_9] : memref<4x128xf32, #tpu.memory_space<vmem>>, vector<4x128xf32>
    %15 = arith.addf %8, %9 : vector<4x128xf32>
    %16 = arith.addf %14, %15 : vector<4x128xf32>
    %c0_10 = arith.constant 0 : index
    %c0_11 = arith.constant 0 : index
    %17 = vector.load %arg7[%c0_10, %c0_11] : memref<4x128xf32, #tpu.memory_space<vmem>>, vector<4x128xf32>
    tpu.vector_store %arg7[%c0_10, %c0_11], %16 {strides = array<i32>} : memref<4x128xf32, #tpu.memory_space<vmem>>, vector<4x128xf32>,
    %c0_i32_12 = arith.constant 0 : i32
    %18 = arith.cmpi eq, %arg1, %c0_i32_12 : i32
    %19 = arith.extui %18 : i1 to i32
    %c0_i32_13 = arith.constant 0 : i32
    %20 = arith.cmpi ne, %19, %c0_i32_13 : i32
    scf.if %20 {
      %c0_14 = arith.constant 0 : index
      %c0_15 = arith.constant 0 : index
      %21 = vector.load %arg6[%c0_14, %c0_15] : memref<4x128xf32, #tpu.memory_space<vmem>>, vector<4x128xf32>
      %cst_16 = arith.constant dense<0.000000e+00> : vector<4xf32>
      %22 = vector.multi_reduction <add>, %21, %cst_16 [1] : vector<4x128xf32> to vector<4xf32>
      %23 = vector.shape_cast %22 : vector<4xf32> to vector<4x1xf32>
      %c0_17 = arith.constant 0 : index
      %c0_18 = arith.constant 0 : index
      %24 = vector.load %arg4[%c0_17, %c0_18] : memref<4x1xf32, #tpu.memory_space<vmem>>, vector<4x1xf32>
      tpu.vector_store %arg4[%c0_17, %c0_18], %23 {strides = array<i32>} : memref<4x1xf32, #tpu.memory_space<vmem>>, vector<4x1xf32>,
      %c0_19 = arith.constant 0 : index
      %c0_20 = arith.constant 0 : index
      %25 = vector.load %arg7[%c0_19, %c0_20] : memref<4x128xf32, #tpu.memory_space<vmem>>, vector<4x128xf32>
      %cst_21 = arith.constant dense<0.000000e+00> : vector<4xf32>
      %26 = vector.multi_reduction <add>, %25, %cst_21 [1] : vector<4x128xf32> to vector<4xf32>
      %27 = vector.shape_cast %26 : vector<4xf32> to vector<4x1xf32>
      %c0_22 = arith.constant 0 : index
      %c0_23 = arith.constant 0 : index
      %28 = vector.load %arg5[%c0_22, %c0_23] : memref<4x1xf32, #tpu.memory_space<vmem>>, vector<4x1xf32>
      tpu.vector_store %arg5[%c0_22, %c0_23], %27 {strides = array<i32>} : memref<4x1xf32, #tpu.memory_space<vmem>>, vector<4x1xf32>,
    } else {
    }
    return
  }
  func.func @transform_0(%arg0: i32, %arg1: i32) -> (i32, i32) {
    %c0_i32 = arith.constant 0 : i32
    return %arg0, %arg1 : i32, i32
  }
  func.func @transform_1(%arg0: i32, %arg1: i32) -> (i32, i32) {
    %c0_i32 = arith.constant 0 : i32
    return %arg0, %arg1 : i32, i32
  }
  func.func @transform_2(%arg0: i32, %arg1: i32) -> (i32, i32) {
    %c0_i32 = arith.constant 0 : i32
    %c0_i32_0 = arith.constant 0 : i32
    return %arg0, %c0_i32 : i32, i32
  }
  func.func @transform_3(%arg0: i32, %arg1: i32) -> (i32, i32) {
    %c0_i32 = arith.constant 0 : i32
    %c0_i32_0 = arith.constant 0 : i32
    return %arg0, %c0_i32 : i32, i32
  }
}

</mosaic_0001>

<llo_original>
// kernel: tpu_custom_call.1
$region0: #{tpu_custom_call.1}
  #allocation0 [shape = 'u32[]', space=smem, size = 0x4, offset = 0x4, fixed_abs, tag = 'smem constant byte address 0x4 - core index']
  #allocation1 [shape = 'u32[72,128]{1,0:T(1,128)}', space=vmem, size = 0x9000, scoped, tag = 'internal scratch']
  #allocation2 [shape = 'f32[4,128]{1,0:T(4,128)}', space=vmem, size = 0x800, scoped, tag = 'scratch operand']
  #allocation3 [shape = 'f32[4,128]{1,0:T(4,128)}', space=vmem, size = 0x800, scoped, tag = 'scratch operand']
  %s0 = inlined_call_operand.hbm [shape: f32[4,128], index: 0, kind: input, shape index: {}]
  %s1 = inlined_call_operand.hbm [shape: f32[4,128], index: 1, kind: input, shape index: {}]
  %s2 = inlined_call_operand.vmem [shape: f32[4,1], index: 2, kind: output, shape index: {0}]
  %s3 = inlined_call_operand.vmem [shape: f32[4,1], index: 3, kind: output, shape index: {1}]
  %4 = xla_tuple %s2, %s3
  %s5 = sld [smem:[#allocation0]]
  $region42: #{tpu_custom_call.1} parent=0
    _
  %s7 = ssub.s32 1, %s5
  %s8 = scalar_select 0, %s7, %s5
  $region1: #{tpu_custom_call.1} parent=0
    #allocation4 [shape = 'u8[2048]{0}', space=vmem, size = 0x800, scoped, tag = 'input window, operand 0, single buffered']
    #allocation5 [shape = 's32[1]{0}', space=sflag, size = 0x4, scoped, tag = 'scoped memory for tpu_custom_call.1']
    #allocation6 [shape = 'u8[2048]{0}', space=vmem, size = 0x800, scoped, tag = 'input window, operand 1, single buffered']
    #allocation7 [shape = 's32[1]{0}', space=sflag, size = 0x4, scoped, tag = 'scoped memory for tpu_custom_call.1']
    %9 = vsyncpa [#allocation5], 0
    %10 = vsyncpa [#allocation7], 0
    // Predicated region
    $region2: #{tpu_custom_call.1} parent=1 // pred_check
      _
    $region3: #{tpu_custom_call.1} parent=1 // pred_check_branch
      %12 = sbr.rel (0) target = $region5
    $region4: #{tpu_custom_call.1} parent=1 // pred_region
      %14 = vsyncadd [#allocation5], 0
      %s16 = sshll.u32 %s0, 4
      %s17 = int_to_ptr.hbm [resolvable:$true] %s16
      %s18 = sshll.u32 [#allocation4], 4
      %s19 = int_to_ptr.vmem [resolvable:$true] %s18
      %21 = dma.hbm_to_vmem [thread:$0]  %s17, 64, %s19, [#allocation5]
    $region5: #{tpu_custom_call.1} parent=1 // pred_fallthru
      _
    // Predicated region
    $region6: #{tpu_custom_call.1} parent=1 // pred_check
      _
    $region7: #{tpu_custom_call.1} parent=1 // pred_check_branch
      %23 = sbr.rel (0) target = $region9
    $region8: #{tpu_custom_call.1} parent=1 // pred_region
      %25 = vsyncadd [#allocation7], 0
      %s27 = sshll.u32 %s1, 4
      %s28 = int_to_ptr.hbm [resolvable:$true] %s27
      %s29 = sshll.u32 [#allocation6], 4
      %s30 = int_to_ptr.vmem [resolvable:$true] %s29
      %32 = dma.hbm_to_vmem [thread:$0]  %s28, 64, %s30, [#allocation7]
    $region9: #{tpu_custom_call.1} parent=1 // pred_fallthru
      _
    // Predicated region
    $region10: #{tpu_custom_call.1} parent=1 // pred_check
      _
    $region11: #{tpu_custom_call.1} parent=1 // pred_check_branch
      %34 = sbr.rel (0) target = $region13
    $region12: #{tpu_custom_call.1} parent=1 // pred_region
      %36 = dma.done [#allocation5], 64
    $region13: #{tpu_custom_call.1} parent=1 // pred_fallthru
      _
    // Predicated region
    $region14: #{tpu_custom_call.1} parent=1 // pred_check
      _
    $region15: #{tpu_custom_call.1} parent=1 // pred_check_branch
      %38 = sbr.rel (0) target = $region17
    $region16: #{tpu_custom_call.1} parent=1 // pred_region
      %40 = dma.done [#allocation7], 64
    $region17: #{tpu_custom_call.1} parent=1 // pred_fallthru
      _
    %p41 = scmp.eq.s32.totalorder 0, 0
    // Predicated region
    $region18: #{tpu_custom_call.1} parent=1 // pred_check
      %p42 = pneg %p41
    $region19: #{tpu_custom_call.1} parent=1 // pred_check_branch
      %44 = sbr.rel (%p42) target = $region21
    $region20: #{tpu_custom_call.1} parent=1 // pred_region
      %45 = vst [vmem:[#allocation2] sm:$0xf] 0.0
      %46 = vst [vmem:[#allocation3] sm:$0xf] 0.0
    $region21: #{tpu_custom_call.1} parent=1 // pred_fallthru
      _
    %v47 = vld [vmem:[#allocation4] sm:$0xf]
    %v48 = vxor.u32 %v47, 2147483648
    %v49 = vmul.f32 %v48, 1.442695
    %v50 = vpow.pop %v49
    %v51 = vadd.f32 %v50, 1.0
    %v52 = vrcp.pop %v51
    %v53 = vmul.f32 %v51, %v52
    %v54 = vsub.f32 1.0, %v53
    %v55 = vmul.f32 %v52, %v54
    %v56 = vadd.f32 %v52, %v55
    %vm57 = vweird.f32 %v51
    %vm58 = vweird.f32 %v52
    %vm59 = vmor %vm57, %vm58
    %v60 = vsel %vm59, %v52, %v56
    %v61 = vand.u32 2147483647, %v51
    %vm62 = vcmp.eq.f32.partialorder %v61, 8.507059e+37
    %v63 = vand.u32 %v51, 2147483648
    %v64 = vor.u32 1.1754944e-38, %v63
    %v65 = vsel %vm62, %v64, %v60
    %v66 = vmul.f32 1.0, %v65
    %v67 = vld [vmem:[#allocation6] sm:$0xf]
    %v68 = vld [vmem:[#allocation2] sm:$0xf]
    %v69 = vmul.f32 %v66, %v67
    %v70 = vadd.f32 %v68, %v69
    %71 = vst [vmem:[#allocation2] sm:$0xf] %v70
    %v72 = vld [vmem:[#allocation3] sm:$0xf]
    %v73 = vadd.f32 %v66, %v67
    %v74 = vadd.f32 %v72, %v73
    %75 = vst [vmem:[#allocation3] sm:$0xf] %v74
    // Predicated region
    $region22: #{tpu_custom_call.1} parent=1 // pred_check
      %p76 = pneg %p41
    $region23: #{tpu_custom_call.1} parent=1 // pred_check_branch
      %78 = sbr.rel (%p76) target = $region25
    $region24: #{tpu_custom_call.1} parent=1 // pred_region
      %v79 = vld [vmem:[#allocation2] sm:$0xf]
      %vm80 = vcmask 1043456
      %v81 = vsel %vm80, %v79, 0.0
      %82 = vadd.xlane.f32.xlu0 %v81
      %v83 = vpop.xlane.xlu0 %82
      %vm84 = vcmask 3072
      %85 = vst.msk [vmem:[%s2] sm:$0xf] %vm84, %v83
      %v86 = vld [vmem:[#allocation3] sm:$0xf]
      %v87 = vsel %vm80, %v86, 0.0
      %88 = vadd.xlane.f32.xlu0 %v87
      %v89 = vpop.xlane.xlu0 %88
      %90 = vst.msk [vmem:[%s3] sm:$0xf] %vm84, %v89
    $region25: #{tpu_custom_call.1} parent=1 // pred_fallthru
      _
    // Predicated region
    $region26: #{tpu_custom_call.1} parent=1 // pred_check
      _
    $region27: #{tpu_custom_call.1} parent=1 // pred_check_branch
      %92 = sbr.rel (0) target = $region29
    $region28: #{tpu_custom_call.1} parent=1 // pred_region
      _
    $region29: #{tpu_custom_call.1} parent=1 // pred_fallthru
      _
    // Predicated region
    $region30: #{tpu_custom_call.1} parent=1 // pred_check
      _
    $region31: #{tpu_custom_call.1} parent=1 // pred_check_branch
      %94 = sbr.rel (0) target = $region33
    $region32: #{tpu_custom_call.1} parent=1 // pred_region
      _
    $region33: #{tpu_custom_call.1} parent=1 // pred_fallthru
      _
    // Predicated region
    $region34: #{tpu_custom_call.1} parent=1 // pred_check
      _
    $region35: #{tpu_custom_call.1} parent=1 // pred_check_branch
      %96 = sbr.rel (0) target = $region37
    $region36: #{tpu_custom_call.1} parent=1 // pred_region
      _
    $region37: #{tpu_custom_call.1} parent=1 // pred_fallthru
      _
    // Predicated region
    $region38: #{tpu_custom_call.1} parent=1 // pred_check
      _
    $region39: #{tpu_custom_call.1} parent=1 // pred_check_branch
      %98 = sbr.rel (0) target = $region41
    $region40: #{tpu_custom_call.1} parent=1 // pred_region
      _
    $region41: #{tpu_custom_call.1} parent=1 // pred_fallthru
      _
    %99 = vsyncpa [#allocation5], 1
    %100 = vsyncpa [#allocation7], 1

</llo_original>
